<compile_context>
chip_gen: v6e
topology: v6e:2x2x1
jax: 0.10.0
libtpu: 0.0.40
codegen_flags: <defaults>
</compile_context>

<pallas_src>
import jax
import jax.numpy as jnp
from jax.experimental import pallas as pl
from jax.experimental.pallas import tpu as pltpu


# -----------------------------------------------------------------------------
# Pallas kernel
# -----------------------------------------------------------------------------
def diffusion_mid_kernel(
    c1_ref,      # VMEM resident: (B, 1, 1)    f32  sqrt(alphas_bar)[t]
    c2_ref,      # VMEM resident: (B, 1, 1)    f32  sqrt(1 - alphas_bar)[t]
    bias1_ref,   # VMEM resident: (B, CHID, 1) f32  time+class embedding + b1
    w1t_ref,     # VMEM resident: (CHID, C)    f32  first 1x1-conv weight^T
    w2t_ref,     # VMEM resident: (C, CHID)    bf16 second 1x1-conv weight^T
    b2_ref,      # VMEM resident: (C, 1)       f32
    x0_ref,      # VMEM block:    (TB, C, HW)  bf16
    noise_ref,   # VMEM block:    (TB, C, HW)  bf16
    h_ref,       # out block:     (TB, C, HW)  f32
    mid_ref,     # out block:     (TB, CHID, HW) bf16
):
    tb = x0_ref.shape[0]
    c_in = x0_ref.shape[1]
    i0 = pl.multiple_of(pl.program_id(0) * tb, tb)

    # extract(...): per-sample coefficients + folded bias, resident in VMEM,
    # sliced per block (no per-step tiny DMAs).
    c1 = c1_ref[pl.ds(i0, tb), :, :]          # (tb, 1, 1)
    c2 = c2_ref[pl.ds(i0, tb), :, :]          # (tb, 1, 1)
    bias1 = bias1_ref[pl.ds(i0, tb), :, :]    # (tb, CHID, 1)

    # forward diffusion (q-sample) on the VPU, in f32 (v5e has no bf16 VALU):
    #   x_t = sqrt(a_bar_t) * x_0 + sqrt(1 - a_bar_t) * noise
    x0 = x0_ref[...].astype(jnp.float32)      # (tb, C, HW)
    noise = noise_ref[...].astype(jnp.float32)
    x_t = c1 * x0 + c2 * noise                # (tb, C, HW)

    # Synthetic stand-in "model", layer 1 (1x1 conv, K = C = 4):
    # unrolled VPU broadcast multiply-adds; HW stays in lanes.
    w1 = w1t_ref[...]                                           # (CHID, C) f32
    hid = bias1 + w1[None, :, 0:1] * x_t[:, 0:1, :]             # (tb, CHID, HW)
    for c in range(1, c_in):
        hid = hid + w1[None, :, c:c + 1] * x_t[:, c:c + 1, :]
    hid = jnp.maximum(hid, 0.0)
    hid_bf = hid.astype(jnp.bfloat16)
    mid_ref[...] = hid_bf                                       # temp_mid (bf16)

    # Layer 2 (1x1 conv, K = CHID = 32) on the MXU, bf16 x bf16 -> f32 accum.
    w2 = w2t_ref[...]                                           # (C, CHID) bf16
    b2 = b2_ref[...]                                            # (C, 1) f32
    for i in range(tb):                                         # tb is small & static
        out = jnp.dot(w2, hid_bf[i], preferred_element_type=jnp.float32)
        h_ref[i] = out + b2                                     # (C, HW)


# -----------------------------------------------------------------------------
# Glue (plain JAX): parameter setup, RNG, layout conversion, embeddings
# -----------------------------------------------------------------------------
def timestep_embedding(t, dim):
    half = dim // 2
    freqs = jnp.exp(
        -jnp.log(10000.0) * jnp.arange(half, dtype=jnp.float32) / float(half)
    )
    args = t.astype(jnp.float32)[:, None] * freqs[None, :]
    return jnp.concatenate([jnp.sin(args), jnp.cos(args)], axis=-1)


def make_params(key, *, beta_1, beta_T, T, C, CHID, DEMB, num_class):
    betas = jnp.linspace(beta_1, beta_T, T).astype(jnp.float32)
    alphas = 1.0 - betas
    alphas_bar = jnp.cumprod(alphas, axis=0)
    k1, k2, k3, k4 = jax.random.split(key, 4)
    return dict(
        sqrt_alphas_bar=jnp.sqrt(alphas_bar),
        sqrt_one_minus_alphas_bar=jnp.sqrt(1.0 - alphas_bar),
        w_temb=0.02 * jax.random.normal(k1, (DEMB, CHID), jnp.float32),
        class_emb=0.02 * jax.random.normal(k2, (num_class, CHID), jnp.float32),
        w1=0.05 * jax.random.normal(k3, (C, CHID), jnp.float32),
        b1=jnp.zeros((1, CHID), jnp.float32),
        w2=0.05 * jax.random.normal(k4, (CHID, C), jnp.float32),
        b2=jnp.zeros((1, C), jnp.float32),
    )


def gaussian_diffusion_mid_forward(
    params, x_0, y_0, key, *, T, cfg=True, cb=False, fix_t=None, augm=None
):
    """x_0: [B, C, H, W] (NCHW, PyTorch convention). Returns (h, temp_mid)."""
    # TODO(synk): `augm` conditioning of the external UNet has no equivalent here.
    del augm
    B, C, H, W = x_0.shape
    HW = H * W
    CHID = params["w1"].shape[1]

    kt, kn, kd = jax.random.split(key, 3)
    if fix_t is None:
        t = jax.random.randint(kt, (B,), 0, T, dtype=jnp.int32)
    else:
        t = jnp.full((B,), fix_t, dtype=jnp.int32)
    # TODO(synk): noise could be generated in-kernel with pltpu.prng_* to save
    # one HBM read, but that changes the RNG stream vs jax.random.
    noise = jax.random.normal(kn, x_0.shape, dtype=jnp.float32)

    # extract(...) coefficients gathered in the wrapper -> (B,1,1) resident VMEM
    c1 = params["sqrt_alphas_bar"][t].astype(jnp.float32)             # (B,)
    c2 = params["sqrt_one_minus_alphas_bar"][t].astype(jnp.float32)   # (B,)
    c1b = c1.reshape(B, 1, 1)
    c2b = c2.reshape(B, 1, 1)

    # NCHW -> [B, C, HW]: a pure reshape.  Cast to bf16 at the kernel boundary
    # to halve input HBM traffic (upcast to f32 inside the kernel).
    x0_f = x_0.reshape(B, C, HW).astype(jnp.bfloat16)
    n_f = noise.reshape(B, C, HW).astype(jnp.bfloat16)

    # conditioning for the stand-in model: time embedding + (maybe dropped)
    # class embedding.  Matches the reference: ONE scalar draw drops the class
    # for the whole batch (y_0 = None), not per-sample.
    temb = timestep_embedding(t, params["w_temb"].shape[0]) @ params["w_temb"]
    cemb = params["class_emb"][y_0]
    if cfg or cb:
        drop = (jax.random.uniform(kd, ()) < 0.1).astype(jnp.float32)
        cemb = (1.0 - drop) * cemb
    # fold b1 into the per-sample bias so the kernel does a single broadcast add
    bias1 = (temb + cemb + params["b1"]).astype(jnp.float32).reshape(B, CHID, 1)

    # weights transposed so the kernel keeps HW in lanes
    w1t = params["w1"].T.astype(jnp.float32)    # (CHID, C)  layer 1 runs on the VPU
    w2t = params["w2"].T.astype(jnp.bfloat16)   # (C, CHID)  layer 2 bf16 MXU operand
    b2 = params["b2"].reshape(C, 1).astype(jnp.float32)

    # Grid / per-step batch tile: 2 steps when B is even (so v7x's 2 TensorCores
    # both get work), otherwise one sample per step.
    num_steps = 2 if (B % 2 == 0 and B >= 2) else B
    TB = B // num_steps

    grid_spec = pltpu.PrefetchScalarGridSpec(
        num_scalar_prefetch=0,
        grid=(num_steps,),
        in_specs=[
            pl.BlockSpec((B, 1, 1), lambda i: (0, 0, 0)),        # c1   (resident)
            pl.BlockSpec((B, 1, 1), lambda i: (0, 0, 0)),        # c2   (resident)
            pl.BlockSpec((B, CHID, 1), lambda i: (0, 0, 0)),     # bias1(resident)
            pl.BlockSpec((CHID, C), lambda i: (0, 0)),           # w1^T (resident)
            pl.BlockSpec((C, CHID), lambda i: (0, 0)),           # w2^T (resident)
            pl.BlockSpec((C, 1), lambda i: (0, 0)),              # b2   (resident)
            pl.BlockSpec((TB, C, HW), lambda i: (i, 0, 0)),      # x_0
            pl.BlockSpec((TB, C, HW), lambda i: (i, 0, 0)),      # noise
        ],
        out_specs=[
            pl.BlockSpec((TB, C, HW), lambda i: (i, 0, 0)),      # h
            pl.BlockSpec((TB, CHID, HW), lambda i: (i, 0, 0)),   # temp_mid (bf16)
        ],
    )

    h_f, mid_f = pl.pallas_call(
        diffusion_mid_kernel,
        out_shape=(
            jax.ShapeDtypeStruct((B, C, HW), jnp.float32),
            jax.ShapeDtypeStruct((B, CHID, HW), jnp.bfloat16),
        ),
        grid_spec=grid_spec,
        compiler_params=pltpu.CompilerParams(
            # batch-tile axis has no cross-iteration dependence -> megacore
            dimension_semantics=("parallel",)
        ),
    )(c1b, c2b, bias1, w1t, w2t, b2, x0_f, n_f)

    # [B, C, HW] is already NCHW modulo a free reshape.
    h = h_f.reshape(B, C, H, W)
    temp_mid = mid_f.reshape(B, CHID, H, W)
    # NOTE: the reference returns `temp_mids` which is an undefined name (typo);
    # we return the obviously intended `temp_mid`.
    return h, temp_mid, (t, noise, c1, c2, bias1)


def _reference_forward(params, x_0, noise, c1, c2, bias1):
    """Pure-JAX reference of the in-kernel math (matching dtypes) for a check."""
    B, C, H, W = x_0.shape
    HW = H * W
    CHID = params["w1"].shape[1]
    # match kernel dtypes: bf16 inputs / w2, f32 accumulate, bf16 mid store
    x0_f = x_0.reshape(B, C, HW).astype(jnp.bfloat16).astype(jnp.float32)
    n_f = noise.reshape(B, C, HW).astype(jnp.bfloat16).astype(jnp.float32)
    x_t = c1[:, None, None] * x0_f + c2[:, None, None] * n_f          # (B, C, HW)
    w1t = params["w1"].T.astype(jnp.float32)                          # (CHID, C)
    hid = jnp.einsum("hc,bcs->bhs", w1t, x_t, precision="highest") + bias1
    hid = jnp.maximum(hid, 0.0)
    hid_bf = hid.astype(jnp.bfloat16)
    w2t = params["w2"].T.astype(jnp.bfloat16).astype(jnp.float32)     # (C, CHID)
    out = jnp.einsum("ch,bhs->bcs", w2t, hid_bf.astype(jnp.float32),
                     precision="highest") + params["b2"].reshape(1, C, 1)
    return out.reshape(B, C, H, W), hid_bf.reshape(B, CHID, H, W)


if __name__ == "__main__":
    B, C, H, W = 2, 4, 16, 16
    T = 50
    CHID, DEMB, NUM_CLASS = 32, 32, 10

    key = jax.random.PRNGKey(0)
    k_param, k_x, k_y, k_fwd = jax.random.split(key, 4)

    params = make_params(
        k_param, beta_1=1e-4, beta_T=0.02, T=T, C=C, CHID=CHID,
        DEMB=DEMB, num_class=NUM_CLASS,
    )
    x_0 = jax.random.normal(k_x, (B, C, H, W), dtype=jnp.float32)
    y_0 = jax.random.randint(k_y, (B,), 0, NUM_CLASS, dtype=jnp.int32)

    h, temp_mid, (t, noise, c1, c2, bias1) = gaussian_diffusion_mid_forward(
        params, x_0, y_0, k_fwd, T=T, cfg=True, cb=False, fix_t=None
    )
    jax.block_until_ready((h, temp_mid))

    assert h.shape == (B, C, H, W)
    assert temp_mid.shape == (B, CHID, H, W)

    # lightweight correctness check against the pure-JAX reference
    # (tolerances relaxed for the bf16 input / bf16 temp_mid path)
    h_ref, mid_ref_arr = _reference_forward(params, x_0, noise, c1, c2, bias1)
    assert jnp.allclose(h, h_ref, rtol=2e-2, atol=2e-2)
    assert jnp.allclose(
        temp_mid.astype(jnp.float32), mid_ref_arr.astype(jnp.float32),
        rtol=2e-2, atol=2e-2,
    )

    print("KERNEL_OK")
</pallas_src>

<mosaic_0001>
module attributes {stable_mosaic.version = 11 : i64} {
  func.func @diffusion_mid_kernel(%arg0: i32, %arg1: memref<2x1x1xf32, #tpu.memory_space<vmem>>, %arg2: memref<2x1x1xf32, #tpu.memory_space<vmem>>, %arg3: memref<2x32x1xf32, #tpu.memory_space<vmem>>, %arg4: memref<32x4xf32, #tpu.memory_space<vmem>>, %arg5: memref<4x32xbf16, #tpu.memory_space<vmem>>, %arg6: memref<4x1xf32, #tpu.memory_space<vmem>>, %arg7: memref<1x4x256xbf16, #tpu.memory_space<vmem>>, %arg8: memref<1x4x256xbf16, #tpu.memory_space<vmem>>, %arg9: memref<1x4x256xf32, #tpu.memory_space<vmem>>, %arg10: memref<1x32x256xbf16, #tpu.memory_space<vmem>>) attributes {dimension_semantics = [#tpu.dimension_semantics<parallel>], iteration_bounds = array<i64: 2>, scalar_prefetch = 0 : i64, scratch_operands = 0 : i64, tpu.core_type = #tpu.core_type<tc>, window_params = [{pipeline_mode = #tpu.pipeline_mode<synchronous>, transform_indices = @transform_0, window_bounds = array<i64: 2, 1, 1>}, {pipeline_mode = #tpu.pipeline_mode<synchronous>, transform_indices = @transform_1, window_bounds = array<i64: 2, 1, 1>}, {pipeline_mode = #tpu.pipeline_mode<synchronous>, transform_indices = @transform_2, window_bounds = array<i64: 2, 32, 1>}, {pipeline_mode = #tpu.pipeline_mode<synchronous>, transform_indices = @transform_3, window_bounds = array<i64: 32, 4>}, {pipeline_mode = #tpu.pipeline_mode<synchronous>, transform_indices = @transform_4, window_bounds = array<i64: 4, 32>}, {pipeline_mode = #tpu.pipeline_mode<synchronous>, transform_indices = @transform_5, window_bounds = array<i64: 4, 1>}, {transform_indices = @transform_6, window_bounds = array<i64: 1, 4, 256>}, {transform_indices = @transform_7, window_bounds = array<i64: 1, 4, 256>}, {transform_indices = @transform_8, window_bounds = array<i64: 1, 4, 256>}, {transform_indices = @transform_9, window_bounds = array<i64: 1, 32, 256>}]} {
    %c1_i32 = arith.constant 1 : i32
    %0 = arith.muli %arg0, %c1_i32 : i32
    %1 = tpu.assume_multiple %0, 1 : i32
    %2 = arith.index_cast %1 : i32 to index
    %c0 = arith.constant 0 : index
    %c0_0 = arith.constant 0 : index
    %3 = vector.load %arg1[%2, %c0, %c0_0] : memref<2x1x1xf32, #tpu.memory_space<vmem>>, vector<1x1x1xf32>
    %4 = arith.index_cast %1 : i32 to index
    %c0_1 = arith.constant 0 : index
    %c0_2 = arith.constant 0 : index
    %5 = vector.load %arg2[%4, %c0_1, %c0_2] : memref<2x1x1xf32, #tpu.memory_space<vmem>>, vector<1x1x1xf32>
    %6 = arith.index_cast %1 : i32 to index
    %c0_3 = arith.constant 0 : index
    %c0_4 = arith.constant 0 : index
    %7 = vector.load %arg3[%6, %c0_3, %c0_4] : memref<2x32x1xf32, #tpu.memory_space<vmem>>, vector<1x32x1xf32>
    %c0_5 = arith.constant 0 : index
    %c0_6 = arith.constant 0 : index
    %c0_7 = arith.constant 0 : index
    %8 = vector.load %arg7[%c0_5, %c0_6, %c0_7] : memref<1x4x256xbf16, #tpu.memory_space<vmem>>, vector<1x4x256xbf16>
    %9 = arith.extf %8 : vector<1x4x256xbf16> to vector<1x4x256xf32>
    %c0_8 = arith.constant 0 : index
    %c0_9 = arith.constant 0 : index
    %c0_10 = arith.constant 0 : index
    %10 = vector.load %arg8[%c0_8, %c0_9, %c0_10] : memref<1x4x256xbf16, #tpu.memory_space<vmem>>, vector<1x4x256xbf16>
    %11 = arith.extf %10 : vector<1x4x256xbf16> to vector<1x4x256xf32>
    %12 = vector.broadcast %3 : vector<1x1x1xf32> to vector<1x4x256xf32>
    %13 = arith.mulf %12, %9 : vector<1x4x256xf32>
    %14 = vector.broadcast %5 : vector<1x1x1xf32> to vector<1x4x256xf32>
    %15 = arith.mulf %14, %11 : vector<1x4x256xf32>
    %16 = arith.addf %13, %15 : vector<1x4x256xf32>
    %c0_11 = arith.constant 0 : index
    %c0_12 = arith.constant 0 : index
    %17 = vector.load %arg4[%c0_11, %c0_12] : memref<32x4xf32, #tpu.memory_space<vmem>>, vector<32x4xf32>
    %18 = vector.extract_strided_slice %17 {offsets = [0, 0], sizes = [32, 1], strides = [1, 1]} : vector<32x4xf32> to vector<32x1xf32>
    %19 = vector.shape_cast %18 : vector<32x1xf32> to vector<1x32x1xf32>
    %20 = vector.extract_strided_slice %16 {offsets = [0, 0, 0], sizes = [1, 1, 256], strides = [1, 1, 1]} : vector<1x4x256xf32> to vector<1x1x256xf32>
    %21 = vector.broadcast %19 : vector<1x32x1xf32> to vector<1x32x256xf32>
    %22 = vector.broadcast %20 : vector<1x1x256xf32> to vector<1x32x256xf32>
    %23 = arith.mulf %21, %22 : vector<1x32x256xf32>
    %24 = vector.broadcast %7 : vector<1x32x1xf32> to vector<1x32x256xf32>
    %25 = arith.addf %24, %23 : vector<1x32x256xf32>
    %26 = vector.extract_strided_slice %17 {offsets = [0, 1], sizes = [32, 1], strides = [1, 1]} : vector<32x4xf32> to vector<32x1xf32>
    %27 = vector.shape_cast %26 : vector<32x1xf32> to vector<1x32x1xf32>
    %28 = vector.extract_strided_slice %16 {offsets = [0, 1, 0], sizes = [1, 1, 256], strides = [1, 1, 1]} : vector<1x4x256xf32> to vector<1x1x256xf32>
    %29 = vector.broadcast %27 : vector<1x32x1xf32> to vector<1x32x256xf32>
    %30 = vector.broadcast %28 : vector<1x1x256xf32> to vector<1x32x256xf32>
    %31 = arith.mulf %29, %30 : vector<1x32x256xf32>
    %32 = arith.addf %25, %31 : vector<1x32x256xf32>
    %33 = vector.extract_strided_slice %17 {offsets = [0, 2], sizes = [32, 1], strides = [1, 1]} : vector<32x4xf32> to vector<32x1xf32>
    %34 = vector.shape_cast %33 : vector<32x1xf32> to vector<1x32x1xf32>
    %35 = vector.extract_strided_slice %16 {offsets = [0, 2, 0], sizes = [1, 1, 256], strides = [1, 1, 1]} : vector<1x4x256xf32> to vector<1x1x256xf32>
    %36 = vector.broadcast %34 : vector<1x32x1xf32> to vector<1x32x256xf32>
    %37 = vector.broadcast %35 : vector<1x1x256xf32> to vector<1x32x256xf32>
    %38 = arith.mulf %36, %37 : vector<1x32x256xf32>
    %39 = arith.addf %32, %38 : vector<1x32x256xf32>
    %40 = vector.extract_strided_slice %17 {offsets = [0, 3], sizes = [32, 1], strides = [1, 1]} : vector<32x4xf32> to vector<32x1xf32>
    %41 = vector.shape_cast %40 : vector<32x1xf32> to vector<1x32x1xf32>
    %42 = vector.extract_strided_slice %16 {offsets = [0, 3, 0], sizes = [1, 1, 256], strides = [1, 1, 1]} : vector<1x4x256xf32> to vector<1x1x256xf32>
    %43 = vector.broadcast %41 : vector<1x32x1xf32> to vector<1x32x256xf32>
    %44 = vector.broadcast %42 : vector<1x1x256xf32> to vector<1x32x256xf32>
    %45 = arith.mulf %43, %44 : vector<1x32x256xf32>
    %46 = arith.addf %39, %45 : vector<1x32x256xf32>
    %cst = arith.constant 0.000000e+00 : f32
    %47 = vector.broadcast %cst : f32 to vector<1x32x256xf32>
    %48 = arith.maximumf %46, %47 : vector<1x32x256xf32>
    %49 = arith.truncf %48 : vector<1x32x256xf32> to vector<1x32x256xbf16>
    %c0_13 = arith.constant 0 : index
    %c0_14 = arith.constant 0 : index
    %c0_15 = arith.constant 0 : index
    %50 = vector.load %arg10[%c0_13, %c0_14, %c0_15] : memref<1x32x256xbf16, #tpu.memory_space<vmem>>, vector<1x32x256xbf16>
    tpu.vector_store %arg10[%c0_13, %c0_14, %c0_15], %49 {strides = array<i32>} : memref<1x32x256xbf16, #tpu.memory_space<vmem>>, vector<1x32x256xbf16>,
    %c0_16 = arith.constant 0 : index
    %c0_17 = arith.constant 0 : index
    %51 = vector.load %arg5[%c0_16, %c0_17] : memref<4x32xbf16, #tpu.memory_space<vmem>>, vector<4x32xbf16>
    %c0_18 = arith.constant 0 : index
    %c0_19 = arith.constant 0 : index
    %52 = vector.load %arg6[%c0_18, %c0_19] : memref<4x1xf32, #tpu.memory_space<vmem>>, vector<4x1xf32>
    %53 = vector.shape_cast %49 : vector<1x32x256xbf16> to vector<32x256xbf16>
    %cst_20 = arith.constant dense<0.000000e+00> : vector<4x256xf32>
    %54 = tpu.matmul %51, %53, %cst_20 {dimension_numbers = #tpu.dot_dimension_numbers<[1], [0], [0], [1], [0, 0, 1, 1], [], []>} : vector<4x32xbf16>, vector<32x256xbf16>, vector<4x256xf32> -> vector<4x256xf32>
    %55 = vector.broadcast %52 : vector<4x1xf32> to vector<4x256xf32>
    %56 = arith.addf %54, %55 : vector<4x256xf32>
    %c0_21 = arith.constant 0 : index
    %c0_22 = arith.constant 0 : index
    %c0_23 = arith.constant 0 : index
    %57 = vector.load %arg9[%c0_21, %c0_22, %c0_23] : memref<1x4x256xf32, #tpu.memory_space<vmem>>, vector<1x4x256xf32>
    %58 = vector.shape_cast %57 : vector<1x4x256xf32> to vector<4x256xf32>
    %59 = vector.shape_cast %56 : vector<4x256xf32> to vector<1x4x256xf32>
    tpu.vector_store %arg9[%c0_21, %c0_22, %c0_23], %59 {strides = array<i32>} : memref<1x4x256xf32, #tpu.memory_space<vmem>>, vector<1x4x256xf32>,
    return
  }
  func.func @transform_0(%arg0: i32) -> (i32, i32, i32) {
    %c0_i32 = arith.constant 0 : i32
    %c0_i32_0 = arith.constant 0 : i32
    %c0_i32_1 = arith.constant 0 : i32
    %c0_i32_2 = arith.constant 0 : i32
    return %c0_i32, %c0_i32_0, %c0_i32_1 : i32, i32, i32
  }
  func.func @transform_1(%arg0: i32) -> (i32, i32, i32) {
    %c0_i32 = arith.constant 0 : i32
    %c0_i32_0 = arith.constant 0 : i32
    %c0_i32_1 = arith.constant 0 : i32
    %c0_i32_2 = arith.constant 0 : i32
    return %c0_i32, %c0_i32_0, %c0_i32_1 : i32, i32, i32
  }
  func.func @transform_2(%arg0: i32) -> (i32, i32, i32) {
    %c0_i32 = arith.constant 0 : i32
    %c0_i32_0 = arith.constant 0 : i32
    %c0_i32_1 = arith.constant 0 : i32
    %c0_i32_2 = arith.constant 0 : i32
    return %c0_i32, %c0_i32_0, %c0_i32_1 : i32, i32, i32
  }
  func.func @transform_3(%arg0: i32) -> (i32, i32) {
    %c0_i32 = arith.constant 0 : i32
    %c0_i32_0 = arith.constant 0 : i32
    %c0_i32_1 = arith.constant 0 : i32
    return %c0_i32, %c0_i32_0 : i32, i32
  }
  func.func @transform_4(%arg0: i32) -> (i32, i32) {
    %c0_i32 = arith.constant 0 : i32
    %c0_i32_0 = arith.constant 0 : i32
    %c0_i32_1 = arith.constant 0 : i32
    return %c0_i32, %c0_i32_0 : i32, i32
  }
  func.func @transform_5(%arg0: i32) -> (i32, i32) {
    %c0_i32 = arith.constant 0 : i32
    %c0_i32_0 = arith.constant 0 : i32
    %c0_i32_1 = arith.constant 0 : i32
    return %c0_i32, %c0_i32_0 : i32, i32
  }
  func.func @transform_6(%arg0: i32) -> (i32, i32, i32) {
    %c0_i32 = arith.constant 0 : i32
    %c0_i32_0 = arith.constant 0 : i32
    %c0_i32_1 = arith.constant 0 : i32
    return %arg0, %c0_i32, %c0_i32_0 : i32, i32, i32
  }
  func.func @transform_7(%arg0: i32) -> (i32, i32, i32) {
    %c0_i32 = arith.constant 0 : i32
    %c0_i32_0 = arith.constant 0 : i32
    %c0_i32_1 = arith.constant 0 : i32
    return %arg0, %c0_i32, %c0_i32_0 : i32, i32, i32
  }
  func.func @transform_8(%arg0: i32) -> (i32, i32, i32) {
    %c0_i32 = arith.constant 0 : i32
    %c0_i32_0 = arith.constant 0 : i32
    %c0_i32_1 = arith.constant 0 : i32
    return %arg0, %c0_i32, %c0_i32_0 : i32, i32, i32
  }
  func.func @transform_9(%arg0: i32) -> (i32, i32, i32) {
    %c0_i32 = arith.constant 0 : i32
    %c0_i32_0 = arith.constant 0 : i32
    %c0_i32_1 = arith.constant 0 : i32
    return %arg0, %c0_i32, %c0_i32_0 : i32, i32, i32
  }
}

</mosaic_0001>

<llo_original>
// kernel: tpu_custom_call.1
$region0: #{tpu_custom_call.1}
  #allocation0 [shape = 'u32[]', space=smem, size = 0x4, offset = 0x4, fixed_abs, tag = 'smem constant byte address 0x4 - core index']
  #allocation1 [shape = 'u32[144,128]{1,0:T(1,128)}', space=vmem, size = 0x12000, scoped, tag = 'internal scratch']
  %s0 = inlined_call_operand.vmem [shape: f32[2,1,1], index: 0, kind: input, shape index: {}]
  %s1 = inlined_call_operand.vmem [shape: f32[2,1,1], index: 1, kind: input, shape index: {}]
  %s2 = inlined_call_operand.vmem [shape: f32[2,32,1], index: 2, kind: input, shape index: {}]
  %s3 = inlined_call_operand.vmem [shape: f32[32,4], index: 3, kind: input, shape index: {}]
  %s4 = inlined_call_operand.vmem [shape: bf16[4,32], index: 4, kind: input, shape index: {}]
  %s5 = inlined_call_operand.vmem [shape: f32[4,1], index: 5, kind: input, shape index: {}]
  %s6 = inlined_call_operand.vmem [shape: bf16[2,4,256], index: 6, kind: input, shape index: {}]
  %s7 = inlined_call_operand.vmem [shape: bf16[2,4,256], index: 7, kind: input, shape index: {}]
  %s8 = inlined_call_operand.hbm [shape: f32[2,4,256], index: 8, kind: output, shape index: {0}]
  %s9 = inlined_call_operand.hbm [shape: bf16[2,32,256], index: 9, kind: output, shape index: {1}]
  %10 = xla_tuple %s8, %s9
  %s11 = sld [smem:[#allocation0]]
  $region73: #{tpu_custom_call.1} parent=0
    _
  %s13 = ssub.s32 1, %s11
  %s14 = scalar_select 0, %s13, %s11
  $region1: #{tpu_custom_call.1} parent=0
    #allocation2 [shape = 'u8[8192]{0}', space=vmem, size = 0x2000, scoped, tag = 'output window, operand 0']
    #allocation3 [shape = 's32[2]{0}', space=sflag, size = 0x8, scoped, tag = 'scoped memory for tpu_custom_call.1']
    #allocation4 [shape = 'u8[32768]{0}', space=vmem, size = 0x8000, scoped, tag = 'output window, operand 1']
    #allocation5 [shape = 's32[2]{0}', space=sflag, size = 0x8, scoped, tag = 'scoped memory for tpu_custom_call.1']
    %15 = vsyncpa [#allocation3], 0
    %s16 = scalar_lea.sflag [#allocation3], 1
    %17 = vsyncpa %s16, 0
    %18 = vsyncpa [#allocation5], 0
    %s19 = scalar_lea.sflag [#allocation5], 1
    %20 = vsyncpa %s19, 0
    loop: start=0, step=1, limit=4
    $region2: #{tpu_custom_call.1} parent=1 // loop_pre_header
      _
    $region3: #{tpu_custom_call.1} parent=1 // loop_header
      %s22 = sphi 0, %s26
      %p23 = scmp.ge.s32.totalorder %s22, 4
      %s30 = sphi 0, %s30
      %s32 = sphi 0, %s30
      %s33 = sphi 0, %s32
      %s47 = sphi 0, %s33
      %s51 = sphi 0, %s51
      %s53 = sphi 0, %s51
      %s54 = sphi 0, %s53
      %s68 = sphi 0, %s54
      %s72 = sphi 0, %s72
      %s74 = sphi 0, %s72
      %s75 = sphi 0, %s74
      %s89 = sphi 0, %s75
      %s93 = sphi 0, %s93
      %s95 = sphi 0, %s93
      %s96 = sphi 0, %s95
      %s110 = sphi 0, %s96
      %s114 = sphi 0, %s114
      %s116 = sphi 0, %s114
      %s117 = sphi 0, %s116
      %s131 = sphi 0, %s117
      %s135 = sphi 0, %s135
      %s137 = sphi 0, %s135
      %s138 = sphi 0, %s137
      %s152 = sphi 0, %s138
      %s158 = sphi 0, %s160
      %s161 = sphi 0, %s158
      %s162 = sphi 0, %s161
      %s178 = sphi 0, %s162
      %s184 = sphi 0, %s186
      %s187 = sphi 0, %s184
      %s188 = sphi 0, %s187
      %s204 = sphi 0, %s188
      %s210 = sphi 0, %s212
      %s213 = sphi 0, %s210
      %s214 = sphi 0, %s213
      %s230 = sphi 0, %s214
      %s236 = sphi 0, %s238
      %s239 = sphi 0, %s236
      %s240 = sphi 0, %s239
      %s256 = sphi 0, %s240
    $region4: #{tpu_custom_call.1} parent=1 // loop_header_branch
      %25 = sbr.rel (%p23) target = $region8
    $region5: #{tpu_custom_call.1} parent=1 // loop_body
      %s27 = ssub.s32 %s22, 1
      %s28 = ssub.s32 %s22, 2
      %s29 = sadd.s32 %s22, 1
      %s31 = sadd.s32 %s30, 1
      %p34 = scmp.eq.s32.totalorder %s22, 1
      %p35 = scmp.ne.s32.totalorder %s30, %s32
      %p36 = scmp.eq.s32.totalorder %s22, 0
      %p37 = por %p35, %p36
      %p38 = scmp.ne.s32.totalorder %s30, %s32
      %p39 = scmp.eq.s32.totalorder %s27, 1
      %p40 = por %p38, %p39
      %p41 = scmp.ne.s32.totalorder %s32, %s33
      %p42 = scmp.eq.s32.totalorder %s27, 0
      %p43 = por %p41, %p42
      %p44 = scmp.ne.s32.totalorder %s32, %s33
      %p45 = scmp.eq.s32.totalorder %s28, 1
      %p46 = por %p44, %p45
      %p48 = scmp.ne.s32.totalorder %s33, %s47
      %p49 = scmp.eq.s32.totalorder %s28, 0
      %p50 = por %p48, %p49
      %s52 = sadd.s32 %s51, 1
      %p55 = scmp.eq.s32.totalorder %s22, 1
      %p56 = scmp.ne.s32.totalorder %s51, %s53
      %p57 = scmp.eq.s32.totalorder %s22, 0
      %p58 = por %p56, %p57
      %p59 = scmp.ne.s32.totalorder %s51, %s53
      %p60 = scmp.eq.s32.totalorder %s27, 1
      %p61 = por %p59, %p60
      %p62 = scmp.ne.s32.totalorder %s53, %s54
      %p63 = scmp.eq.s32.totalorder %s27, 0
      %p64 = por %p62, %p63
      %p65 = scmp.ne.s32.totalorder %s53, %s54
      %p66 = scmp.eq.s32.totalorder %s28, 1
      %p67 = por %p65, %p66
      %p69 = scmp.ne.s32.totalorder %s54, %s68
      %p70 = scmp.eq.s32.totalorder %s28, 0
      %p71 = por %p69, %p70
      %s73 = sadd.s32 %s72, 1
      %p76 = scmp.eq.s32.totalorder %s22, 1
      %p77 = scmp.ne.s32.totalorder %s72, %s74
      %p78 = scmp.eq.s32.totalorder %s22, 0
      %p79 = por %p77, %p78
      %p80 = scmp.ne.s32.totalorder %s72, %s74
      %p81 = scmp.eq.s32.totalorder %s27, 1
      %p82 = por %p80, %p81
      %p83 = scmp.ne.s32.totalorder %s74, %s75
      %p84 = scmp.eq.s32.totalorder %s27, 0
      %p85 = por %p83, %p84
      %p86 = scmp.ne.s32.totalorder %s74, %s75
      %p87 = scmp.eq.s32.totalorder %s28, 1
      %p88 = por %p86, %p87
      %p90 = scmp.ne.s32.totalorder %s75, %s89
      %p91 = scmp.eq.s32.totalorder %s28, 0
      %p92 = por %p90, %p91
      %s94 = sadd.s32 %s93, 1
      %p97 = scmp.eq.s32.totalorder %s22, 1
      %p98 = scmp.ne.s32.totalorder %s93, %s95
      %p99 = scmp.eq.s32.totalorder %s22, 0
      %p100 = por %p98, %p99
      %p101 = scmp.ne.s32.totalorder %s93, %s95
      %p102 = scmp.eq.s32.totalorder %s27, 1
      %p103 = por %p101, %p102
      %p104 = scmp.ne.s32.totalorder %s95, %s96
      %p105 = scmp.eq.s32.totalorder %s27, 0
      %p106 = por %p104, %p105
      %p107 = scmp.ne.s32.totalorder %s95, %s96
      %p108 = scmp.eq.s32.totalorder %s28, 1
      %p109 = por %p107, %p108
      %p111 = scmp.ne.s32.totalorder %s96, %s110
      %p112 = scmp.eq.s32.totalorder %s28, 0
      %p113 = por %p111, %p112
      %s115 = sadd.s32 %s114, 1
      %p118 = scmp.eq.s32.totalorder %s22, 1
      %p119 = scmp.ne.s32.totalorder %s114, %s116
      %p120 = scmp.eq.s32.totalorder %s22, 0
      %p121 = por %p119, %p120
      %p122 = scmp.ne.s32.totalorder %s114, %s116
      %p123 = scmp.eq.s32.totalorder %s27, 1
      %p124 = por %p122, %p123
      %p125 = scmp.ne.s32.totalorder %s116, %s117
      %p126 = scmp.eq.s32.totalorder %s27, 0
      %p127 = por %p125, %p126
      %p128 = scmp.ne.s32.totalorder %s116, %s117
      %p129 = scmp.eq.s32.totalorder %s28, 1
      %p130 = por %p128, %p129
      %p132 = scmp.ne.s32.totalorder %s117, %s131
      %p133 = scmp.eq.s32.totalorder %s28, 0
      %p134 = por %p132, %p133
      %s136 = sadd.s32 %s135, 1
      %p139 = scmp.eq.s32.totalorder %s22, 1
      %p140 = scmp.ne.s32.totalorder %s135, %s137
      %p141 = scmp.eq.s32.totalorder %s22, 0
      %p142 = por %p140, %p141
      %p143 = scmp.ne.s32.totalorder %s135, %s137
      %p144 = scmp.eq.s32.totalorder %s27, 1
      %p145 = por %p143, %p144
      %p146 = scmp.ne.s32.totalorder %s137, %s138
      %p147 = scmp.eq.s32.totalorder %s27, 0
      %p148 = por %p146, %p147
      %p149 = scmp.ne.s32.totalorder %s137, %s138
      %p150 = scmp.eq.s32.totalorder %s28, 1
      %p151 = por %p149, %p150
      %p153 = scmp.ne.s32.totalorder %s138, %s152
      %p154 = scmp.eq.s32.totalorder %s28, 0
      %p155 = por %p153, %p154
      %s156 = ssub.s32 %s22, %s29
      %p157 = scmp.eq.s32.totalorder %s156, 0
      %s159 = sadd.s32 %s158, 1
      %s160 = scalar_select %p157, %s158, %s159
      %p163 = pneg %p157
      %p164 = scmp.eq.s32.totalorder %s22, 1
      %p165 = por %p163, %p164
      %p166 = scmp.ne.s32.totalorder %s158, %s161
      %p167 = scmp.eq.s32.totalorder %s22, 0
      %p168 = por %p166, %p167
      %p169 = scmp.ne.s32.totalorder %s158, %s161
      %p170 = scmp.eq.s32.totalorder %s27, 1
      %p171 = por %p169, %p170
      %p172 = scmp.ne.s32.totalorder %s161, %s162
      %p173 = scmp.eq.s32.totalorder %s27, 0
      %p174 = por %p172, %p173
      %p175 = scmp.ne.s32.totalorder %s161, %s162
      %p176 = scmp.eq.s32.totalorder %s28, 1
      %p177 = por %p175, %p176
      %p179 = scmp.ne.s32.totalorder %s162, %s178
      %p180 = scmp.eq.s32.totalorder %s28, 0
      %p181 = por %p179, %p180
      %s182 = ssub.s32 %s22, %s29
      %p183 = scmp.eq.s32.totalorder %s182, 0
      %s185 = sadd.s32 %s184, 1
      %s186 = scalar_select %p183, %s184, %s185
      %p189 = pneg %p183
      %p190 = scmp.eq.s32.totalorder %s22, 1
      %p191 = por %p189, %p190
      %p192 = scmp.ne.s32.totalorder %s184, %s187
      %p193 = scmp.eq.s32.totalorder %s22, 0
      %p194 = por %p192, %p193
      %p195 = scmp.ne.s32.totalorder %s184, %s187
      %p196 = scmp.eq.s32.totalorder %s27, 1
      %p197 = por %p195, %p196
      %p198 = scmp.ne.s32.totalorder %s187, %s188
      %p199 = scmp.eq.s32.totalorder %s27, 0
      %p200 = por %p198, %p199
      %p201 = scmp.ne.s32.totalorder %s187, %s188
      %p202 = scmp.eq.s32.totalorder %s28, 1
      %p203 = por %p201, %p202
      %p205 = scmp.ne.s32.totalorder %s188, %s204
      %p206 = scmp.eq.s32.totalorder %s28, 0
      %p207 = por %p205, %p206
      %s208 = ssub.s32 %s22, %s29
      %p209 = scmp.eq.s32.totalorder %s208, 0
      %s211 = sadd.s32 %s210, 1
      %s212 = scalar_select %p209, %s210, %s211
      %p215 = pneg %p209
      %p216 = scmp.eq.s32.totalorder %s22, 1
      %p217 = por %p215, %p216
      %p218 = scmp.ne.s32.totalorder %s210, %s213
      %p219 = scmp.eq.s32.totalorder %s22, 0
      %p220 = por %p218, %p219
      %p221 = scmp.ne.s32.totalorder %s210, %s213
      %p222 = scmp.eq.s32.totalorder %s27, 1
      %p223 = por %p221, %p222
      %p224 = scmp.ne.s32.totalorder %s213, %s214
      %p225 = scmp.eq.s32.totalorder %s27, 0
      %p226 = por %p224, %p225
      %p227 = scmp.ne.s32.totalorder %s213, %s214
      %p228 = scmp.eq.s32.totalorder %s28, 1
      %p229 = por %p227, %p228
      %p231 = scmp.ne.s32.totalorder %s214, %s230
      %p232 = scmp.eq.s32.totalorder %s28, 0
      %p233 = por %p231, %p232
      %s234 = ssub.s32 %s22, %s29
      %p235 = scmp.eq.s32.totalorder %s234, 0
      %s237 = sadd.s32 %s236, 1
      %s238 = scalar_select %p235, %s236, %s237
      %p241 = pneg %p235
      %p242 = scmp.eq.s32.totalorder %s22, 1
      %p243 = por %p241, %p242
      %p244 = scmp.ne.s32.totalorder %s236, %s239
      %p245 = scmp.eq.s32.totalorder %s22, 0
      %p246 = por %p244, %p245
      %p247 = scmp.ne.s32.totalorder %s236, %s239
      %p248 = scmp.eq.s32.totalorder %s27, 1
      %p249 = por %p247, %p248
      %p250 = scmp.ne.s32.totalorder %s239, %s240
      %p251 = scmp.eq.s32.totalorder %s27, 0
      %p252 = por %p250, %p251
      %p253 = scmp.ne.s32.totalorder %s239, %s240
      %p254 = scmp.eq.s32.totalorder %s28, 1
      %p255 = por %p253, %p254
      %p257 = scmp.ne.s32.totalorder %s240, %s256
      %p258 = scmp.eq.s32.totalorder %s28, 0
      %p259 = por %p257, %p258
      %p260 = scmp.le.s32.totalorder 1, %s22
      %p261 = scmp.lt.s32.totalorder %s22, 3
      %p262 = pnand %p260, %p261
      %p263 = pneg %p262
      // Predicated region
      $region9: #{tpu_custom_call.1} parent=5 // pred_check
        _
      $region10: #{tpu_custom_call.1} parent=5 // pred_check_branch
        %265 = sbr.rel (%p262) target = $region12
      $region11: #{tpu_custom_call.1} parent=5 // pred_region
        %s266 = ssub.s32 %s22, 1
        // Predicated region
        $region13: #{tpu_custom_call.1} parent=11 // pred_check
          %p267 = pneg %p43
        $region14: #{tpu_custom_call.1} parent=11 // pred_check_branch
          %269 = sbr.rel (%p267) target = $region16
        $region15: #{tpu_custom_call.1} parent=11 // pred_region
          _
        $region16: #{tpu_custom_call.1} parent=11 // pred_fallthru
          _
        // Predicated region
        $region17: #{tpu_custom_call.1} parent=11 // pred_check
          %p270 = pneg %p64
        $region18: #{tpu_custom_call.1} parent=11 // pred_check_branch
          %272 = sbr.rel (%p270) target = $region20
        $region19: #{tpu_custom_call.1} parent=11 // pred_region
          _
        $region20: #{tpu_custom_call.1} parent=11 // pred_fallthru
          _
        // Predicated region
        $region21: #{tpu_custom_call.1} parent=11 // pred_check
          %p273 = pneg %p85
        $region22: #{tpu_custom_call.1} parent=11 // pred_check_branch
          %275 = sbr.rel (%p273) target = $region24
        $region23: #{tpu_custom_call.1} parent=11 // pred_region
          _
        $region24: #{tpu_custom_call.1} parent=11 // pred_fallthru
          _
        // Predicated region
        $region25: #{tpu_custom_call.1} parent=11 // pred_check
          %p276 = pneg %p106
        $region26: #{tpu_custom_call.1} parent=11 // pred_check_branch
          %278 = sbr.rel (%p276) target = $region28
        $region27: #{tpu_custom_call.1} parent=11 // pred_region
          _
        $region28: #{tpu_custom_call.1} parent=11 // pred_fallthru
          _
        // Predicated region
        $region29: #{tpu_custom_call.1} parent=11 // pred_check
          %p279 = pneg %p127
        $region30: #{tpu_custom_call.1} parent=11 // pred_check_branch
          %281 = sbr.rel (%p279) target = $region32
        $region31: #{tpu_custom_call.1} parent=11 // pred_region
          _
        $region32: #{tpu_custom_call.1} parent=11 // pred_fallthru
          _
        // Predicated region
        $region33: #{tpu_custom_call.1} parent=11 // pred_check
          %p282 = pneg %p148
        $region34: #{tpu_custom_call.1} parent=11 // pred_check_branch
          %284 = sbr.rel (%p282) target = $region36
        $region35: #{tpu_custom_call.1} parent=11 // pred_region
          _
        $region36: #{tpu_custom_call.1} parent=11 // pred_fallthru
          _
      $region12: #{tpu_custom_call.1} parent=5 // pred_fallthru
        _
      %p285 = scmp.lt.s32.totalorder %s22, 2
      // Predicated region
      $region37: #{tpu_custom_call.1} parent=5 // pred_check
        %p286 = pneg %p285
      $region38: #{tpu_custom_call.1} parent=5 // pred_check_branch
        %288 = sbr.rel (%p286) target = $region40
      $region39: #{tpu_custom_call.1} parent=5 // pred_region
        // Predicated region
        $region41: #{tpu_custom_call.1} parent=39 // pred_check
          %p289 = pneg %p168
        $region42: #{tpu_custom_call.1} parent=39 // pred_check_branch
          %291 = sbr.rel (%p289) target = $region44
        $region43: #{tpu_custom_call.1} parent=39 // pred_region
          %p292 = scmp.lt.s32.totalorder %s22, 1
          %s293 = scalar_select %p292, %s22, 1
          %s294 = smul.addr %s293, 2
          %s295 = smul.addr %s294, 2
          %s296 = scalar_lea.vmem %s6, %s295
        $region44: #{tpu_custom_call.1} parent=39 // pred_fallthru
          _
        // Predicated region
        $region45: #{tpu_custom_call.1} parent=39 // pred_check
          %p297 = pneg %p194
        $region46: #{tpu_custom_call.1} parent=39 // pred_check_branch
          %299 = sbr.rel (%p297) target = $region48
        $region47: #{tpu_custom_call.1} parent=39 // pred_region
          %p300 = scmp.lt.s32.totalorder %s22, 1
          %s301 = scalar_select %p300, %s22, 1
          %s302 = smul.addr %s301, 2
          %s303 = smul.addr %s302, 2
          %s304 = scalar_lea.vmem %s7, %s303
        $region48: #{tpu_custom_call.1} parent=39 // pred_fallthru
          _
      $region40: #{tpu_custom_call.1} parent=5 // pred_fallthru
        _
      %p305 = scmp.le.s32.totalorder 1, %s22
      %p306 = scmp.lt.s32.totalorder %s22, 3
      %p307 = pnand %p305, %p306
      %p308 = pneg %p307
      // Predicated region
      $region49: #{tpu_custom_call.1} parent=5 // pred_check
        _
      $region50: #{tpu_custom_call.1} parent=5 // pred_check_branch
        %310 = sbr.rel (%p307) target = $region52
      $region51: #{tpu_custom_call.1} parent=5 // pred_region
        %s311 = ssub.s32 %s22, 1
        %p312 = pneg %p43
        %p313 = pneg %p40
        %p314 = pneg %p64
        %p315 = pneg %p61
        %p316 = pneg %p85
        %p317 = pneg %p82
        %p318 = pneg %p106
        %p319 = pneg %p103
        %p320 = pneg %p127
        %p321 = pneg %p124
        %p322 = pneg %p148
        %p323 = pneg %p145
        %p324 = scmp.lt.s32.totalorder %s27, 1
        %s325 = scalar_select %p324, %s27, 1
        %s326 = smul.addr %s325, 2
        %s327 = smul.addr %s326, 2
        %s328 = scalar_lea.vmem %s6, %s327
        %p329 = pneg %p174
        %p330 = pneg %p171
        %p331 = scmp.lt.s32.totalorder %s27, 1
        %s332 = scalar_select %p331, %s27, 1
        %s333 = smul.addr %s332, 2
        %s334 = smul.addr %s333, 2
        %s335 = scalar_lea.vmem %s7, %s334
        %p336 = pneg %p200
        %p337 = pneg %p197
        %p338 = pneg %p226
        %p339 = pneg %p223
        %s340 = sand.u32 %s213, 1
        %s341 = scalar_lea.sflag [#allocation3], %s340
        %s342 = sand.u32 %s213, 1
        %s343 = smul.addr %s342, 8
        %s344 = scalar_lea.vmem [#allocation2], %s343
        %p345 = pneg %p252
        %p346 = pneg %p249
        %s347 = sand.u32 %s239, 1
        %s348 = scalar_lea.sflag [#allocation5], %s347
        %s349 = sand.u32 %s239, 1
        %s350 = smul.addr %s349, 32
        %s351 = scalar_lea.vmem [#allocation4], %s350
        %p352 = scmp.lt.s32.totalorder %s27, 1
        %s353 = scalar_select %p352, %s27, 1
        %s354 = smul.addr %s353, 2
        %s355 = smul.addr %s354, 2
        %s356 = scalar_lea.vmem %s6, %s355
        %p357 = scmp.lt.s32.totalorder %s27, 1
        %s358 = scalar_select %p357, %s27, 1
        %s359 = smul.addr %s358, 2
        %s360 = smul.addr %s359, 2
        %s361 = scalar_lea.vmem %s7, %s360
        %s363 = scalar_lea.vmem %s0, %s27
        %v364 = vld [vmem:[%s363] sm:$0x1]
        %s365 = scalar_lea.vmem %s1, %s27
        %v366 = vld [vmem:[%s365] sm:$0x1]
        %s367 = smul.u32 %s27, 32
        %s368 = scalar_lea.vmem %s2, %s367
        %v369 = vld [vmem:[%s368] sm:$0xff]
        %v370 = vld [vmem:[%s368 + $0x8] sm:$0xff]
        %v371 = vld [vmem:[%s368 + $0x10] sm:$0xff]
        %v372 = vld [vmem:[%s368 + $0x18] sm:$0xff]
        %v373 = vld [vmem:[%s356] sm:$0xf]
        %v374 = vunpack.c.l.bf16 %v373
        %v375 = vld [vmem:[%s361] sm:$0xf]
        %v376 = vunpack.c.l.bf16 %v375
        %v378 = vlaneseq
        %v379 = vshrl.u32 %v378, 7
        %v380 = vsub.s32 0, %v379
        %v381 = vrot.slane %v364, %v380
        %382 = vset.pattern.permute.xlu0 0
        %383 = vperm.xlu0 %382, %v381
        %v384 = vpop.permute.xlu0 %383
        %v386 = vmul.f32 %v384, %v374
        %v388 = vlaneseq
        %v389 = vshrl.u32 %v388, 7
        %v390 = vsub.s32 0, %v389
        %v391 = vrot.slane %v366, %v390
        %392 = vset.pattern.permute.xlu0 0
        %393 = vperm.xlu0 %392, %v391
        %v394 = vpop.permute.xlu0 %393
        %v396 = vmul.f32 %v394, %v376
        %v397 = vadd.f32 %v386, %v396
        %v398 = vld [vmem:[%s3] sm:$0xff]
        %v399 = vld [vmem:[%s3 + $0x8] sm:$0xff]
        %v400 = vld [vmem:[%s3 + $0x10] sm:$0xff]
        %v401 = vld [vmem:[%s3 + $0x18] sm:$0xff]
        %403 = vset.pattern.permute.xlu0 0
        %404 = vperm.xlu0 %403, %v398
        %v405 = vpop.permute.xlu0 %404
        %408 = vset.pattern.permute.xlu0 0
        %409 = vperm.xlu0 %408, %v399
        %v410 = vpop.permute.xlu0 %409
        %413 = vset.pattern.permute.xlu0 0
        %414 = vperm.xlu0 %413, %v400
        %v415 = vpop.permute.xlu0 %414
        %418 = vset.pattern.permute.xlu0 0
        %419 = vperm.xlu0 %418, %v401
        %v420 = vpop.permute.xlu0 %419
        %v423 = vlaneseq
        %v424 = vshrl.u32 %v423, 7
        %v425 = vsub.s32 0, %v424
        %v426 = vrot.slane %v397, %v425
        %v427 = vlaneseq
        %v428 = vshrl.u32 %v427, 7
        %v429 = vsub.s32 4, %v428
        %v430 = vrot.slane %v397, %v429
        %v433 = vlaneseq
        %v434 = vshrl.u32 %v433, 7
        %v435 = vsub.s32 0, %v434
        %v436 = vrot.slane %v426, %v435
        %v437 = vlaneseq
        %v438 = vshrl.u32 %v437, 7
        %v439 = vsub.s32 0, %v438
        %v440 = vrot.slane %v430, %v439
        %v441 = vmul.f32 %v405, %v436
        %v442 = vmul.f32 %v405, %v440
        %v443 = vmul.f32 %v410, %v436
        %v444 = vmul.f32 %v410, %v440
        %v445 = vmul.f32 %v415, %v436
        %v446 = vmul.f32 %v415, %v440
        %v447 = vmul.f32 %v420, %v436
        %v448 = vmul.f32 %v420, %v440
        %450 = vset.pattern.permute.xlu0 0
        %451 = vperm.xlu0 %450, %v369
        %v452 = vpop.permute.xlu0 %451
        %455 = vset.pattern.permute.xlu0 0
        %456 = vperm.xlu0 %455, %v370
        %v457 = vpop.permute.xlu0 %456
        %460 = vset.pattern.permute.xlu0 0
        %461 = vperm.xlu0 %460, %v371
        %v462 = vpop.permute.xlu0 %461
        %465 = vset.pattern.permute.xlu0 0
        %466 = vperm.xlu0 %465, %v372
        %v467 = vpop.permute.xlu0 %466
        %v469 = vadd.f32 %v452, %v441
        %v470 = vadd.f32 %v452, %v442
        %v471 = vadd.f32 %v457, %v443
        %v472 = vadd.f32 %v457, %v444
        %v473 = vadd.f32 %v462, %v445
        %v474 = vadd.f32 %v462, %v446
        %v475 = vadd.f32 %v467, %v447
        %v476 = vadd.f32 %v467, %v448
        %477 = vset.pattern.permute.xlu0 1
        %478 = vperm.xlu0 %477, %v398
        %v479 = vpop.permute.xlu0 %478
        %481 = vset.pattern.permute.xlu0 1
        %482 = vperm.xlu0 %481, %v399
        %v483 = vpop.permute.xlu0 %482
        %485 = vset.pattern.permute.xlu0 1
        %486 = vperm.xlu0 %485, %v400
        %v487 = vpop.permute.xlu0 %486
        %489 = vset.pattern.permute.xlu0 1
        %490 = vperm.xlu0 %489, %v401
        %v491 = vpop.permute.xlu0 %490
        %v493 = vlaneseq
        %v494 = vshrl.u32 %v493, 7
        %v495 = vsub.s32 1, %v494
        %v496 = vrot.slane %v397, %v495
        %v497 = vlaneseq
        %v498 = vshrl.u32 %v497, 7
        %v499 = vsub.s32 5, %v498
        %v500 = vrot.slane %v397, %v499
        %v503 = vlaneseq
        %v504 = vshrl.u32 %v503, 7
        %v505 = vsub.s32 1, %v504
        %v506 = vrot.slane %v496, %v505
        %v507 = vlaneseq
        %v508 = vshrl.u32 %v507, 7
        %v509 = vsub.s32 1, %v508
        %v510 = vrot.slane %v500, %v509
        %v511 = vmul.f32 %v479, %v506
        %v512 = vmul.f32 %v479, %v510
        %v513 = vmul.f32 %v483, %v506
        %v514 = vmul.f32 %v483, %v510
        %v515 = vmul.f32 %v487, %v506
        %v516 = vmul.f32 %v487, %v510
        %v517 = vmul.f32 %v491, %v506
        %v518 = vmul.f32 %v491, %v510
        %v519 = vadd.f32 %v469, %v511
        %v520 = vadd.f32 %v470, %v512
        %v521 = vadd.f32 %v471, %v513
        %v522 = vadd.f32 %v472, %v514
        %v523 = vadd.f32 %v473, %v515
        %v524 = vadd.f32 %v474, %v516
        %v525 = vadd.f32 %v475, %v517
        %v526 = vadd.f32 %v476, %v518
        %527 = vset.pattern.permute.xlu0 2
        %528 = vperm.xlu0 %527, %v398
        %v529 = vpop.permute.xlu0 %528
        %531 = vset.pattern.permute.xlu0 2
        %532 = vperm.xlu0 %531, %v399
        %v533 = vpop.permute.xlu0 %532
        %535 = vset.pattern.permute.xlu0 2
        %536 = vperm.xlu0 %535, %v400
        %v537 = vpop.permute.xlu0 %536
        %539 = vset.pattern.permute.xlu0 2
        %540 = vperm.xlu0 %539, %v401
        %v541 = vpop.permute.xlu0 %540
        %v543 = vlaneseq
        %v544 = vshrl.u32 %v543, 7
        %v545 = vsub.s32 2, %v544
        %v546 = vrot.slane %v397, %v545
        %v547 = vlaneseq
        %v548 = vshrl.u32 %v547, 7
        %v549 = vsub.s32 6, %v548
        %v550 = vrot.slane %v397, %v549
        %v553 = vlaneseq
        %v554 = vshrl.u32 %v553, 7
        %v555 = vsub.s32 2, %v554
        %v556 = vrot.slane %v546, %v555
        %v557 = vlaneseq
        %v558 = vshrl.u32 %v557, 7
        %v559 = vsub.s32 2, %v558
        %v560 = vrot.slane %v550, %v559
        %v561 = vmul.f32 %v529, %v556
        %v562 = vmul.f32 %v529, %v560
        %v563 = vmul.f32 %v533, %v556
        %v564 = vmul.f32 %v533, %v560
        %v565 = vmul.f32 %v537, %v556
        %v566 = vmul.f32 %v537, %v560
        %v567 = vmul.f32 %v541, %v556
        %v568 = vmul.f32 %v541, %v560
        %v569 = vadd.f32 %v519, %v561
        %v570 = vadd.f32 %v520, %v562
        %v571 = vadd.f32 %v521, %v563
        %v572 = vadd.f32 %v522, %v564
        %v573 = vadd.f32 %v523, %v565
        %v574 = vadd.f32 %v524, %v566
        %v575 = vadd.f32 %v525, %v567
        %v576 = vadd.f32 %v526, %v568
        %577 = vset.pattern.permute.xlu0 3
        %578 = vperm.xlu0 %577, %v398
        %v579 = vpop.permute.xlu0 %578
        %581 = vset.pattern.permute.xlu0 3
        %582 = vperm.xlu0 %581, %v399
        %v583 = vpop.permute.xlu0 %582
        %585 = vset.pattern.permute.xlu0 3
        %586 = vperm.xlu0 %585, %v400
        %v587 = vpop.permute.xlu0 %586
        %589 = vset.pattern.permute.xlu0 3
        %590 = vperm.xlu0 %589, %v401
        %v591 = vpop.permute.xlu0 %590
        %v593 = vlaneseq
        %v594 = vshrl.u32 %v593, 7
        %v595 = vsub.s32 3, %v594
        %v596 = vrot.slane %v397, %v595
        %v597 = vlaneseq
        %v598 = vshrl.u32 %v597, 7
        %v599 = vsub.s32 7, %v598
        %v600 = vrot.slane %v397, %v599
        %v603 = vlaneseq
        %v604 = vshrl.u32 %v603, 7
        %v605 = vsub.s32 3, %v604
        %v606 = vrot.slane %v596, %v605
        %v607 = vlaneseq
        %v608 = vshrl.u32 %v607, 7
        %v609 = vsub.s32 3, %v608
        %v610 = vrot.slane %v600, %v609
        %v611 = vmul.f32 %v579, %v606
        %v612 = vmul.f32 %v579, %v610
        %v613 = vmul.f32 %v583, %v606
        %v614 = vmul.f32 %v583, %v610
        %v615 = vmul.f32 %v587, %v606
        %v616 = vmul.f32 %v587, %v610
        %v617 = vmul.f32 %v591, %v606
        %v618 = vmul.f32 %v591, %v610
        %v619 = vadd.f32 %v569, %v611
        %v620 = vadd.f32 %v570, %v612
        %v621 = vadd.f32 %v571, %v613
        %v622 = vadd.f32 %v572, %v614
        %v623 = vadd.f32 %v573, %v615
        %v624 = vadd.f32 %v574, %v616
        %v625 = vadd.f32 %v575, %v617
        %v626 = vadd.f32 %v576, %v618
        %v627 = vmax.f32 %v619, 0.0
        %v628 = vmax.f32 %v620, 0.0
        %v629 = vmax.f32 %v621, 0.0
        %v630 = vmax.f32 %v622, 0.0
        %v631 = vmax.f32 %v623, 0.0
        %v632 = vmax.f32 %v624, 0.0
        %v633 = vmax.f32 %v625, 0.0
        %v634 = vmax.f32 %v626, 0.0
        %v635 = vpack.c.bf16 %v629, %v627
        %v636 = vpack.c.bf16 %v630, %v628
        %v637 = vpack.c.bf16 %v633, %v631
        %v638 = vpack.c.bf16 %v634, %v632
        %v643 = vunpack.c.l.b16 %v635
        %v644 = vunpack.c.l.b16 %v636
        %v645 = vunpack.c.h.b16 %v635
        %v646 = vunpack.c.h.b16 %v636
        %v647 = vunpack.c.l.b16 %v637
        %v648 = vunpack.c.l.b16 %v638
        %v649 = vunpack.c.h.b16 %v637
        %v650 = vunpack.c.h.b16 %v638
        %v651 = vpack.c.b16 %v644, %v643
        %v652 = vpack.c.b16 %v646, %v645
        %v653 = vpack.c.b16 %v648, %v647
        %v654 = vpack.c.b16 %v650, %v649
        %659 = vst [vmem:[%s351] sm:$0xff] %v651
        %660 = vst [vmem:[%s351 + $0x8] sm:$0xff] %v652
        %661 = vst [vmem:[%s351 + $0x10] sm:$0xff] %v653
        %662 = vst [vmem:[%s351 + $0x18] sm:$0xff] %v654
        %v663 = vld [vmem:[%s4] sm:$0x3]
        %v664 = vld [vmem:[%s5] sm:$0xf]
        %666 = vset.pattern.permute.xlu0 0
        %667 = vperm.xlu0 %666, %v664
        %v668 = vpop.permute.xlu0 %667
        %vm670 = vcmask 261120
        %v672 = vsel %vm670, %v663, 0
        %674 = vmatprep.subr.bf16.mxu0 0
        %675 = vmatpush1.bf16.msra.mxu0 0
        %676 = vmatprep.subr.bf16.mxu0 0
        %677 = vmatpush1.bf16.msra.mxu0 0
        %678 = vmatprep.subr.bf16.mxu0 0
        %679 = vmatpush1.bf16.msra.mxu0 0
        %680 = vmatprep.subr.bf16.mxu0 0
        %681 = vmatpush1.bf16.msra.mxu0 0
        %682 = vmatprep.subr.bf16.mxu0 0
        %683 = vmatpush1.bf16.msra.mxu0 0
        %684 = vmatprep.subr.bf16.mxu0 0
        %685 = vmatpush1.bf16.msra.mxu0 0
        %686 = vmatprep.subr.bf16.mxu0 %v638
        %687 = vmatpush1.bf16.msra.mxu0 %v637
        %688 = vmatprep.subr.bf16.mxu0 %v636
        %689 = vmatpush1.bf16.msra.mxu0 %v635
        %690 = vmatprep.subr.bf16.mxu0 0
        %691 = vmatpush2.bf16.msra.mxu0 0
        %692 = vmatprep.subr.bf16.mxu0 0
        %693 = vmatpush2.bf16.msra.mxu0 0
        %694 = vmatprep.subr.bf16.mxu0 0
        %695 = vmatpush2.bf16.msra.mxu0 0
        %696 = vmatprep.subr.bf16.mxu0 0
        %697 = vmatpush2.bf16.msra.mxu0 0
        %698 = vmatprep.subr.bf16.mxu0 0
        %699 = vmatpush2.bf16.msra.mxu0 0
        %700 = vmatprep.subr.bf16.mxu0 0
        %701 = vmatpush2.bf16.msra.mxu0 0
        %702 = vmatprep.subr.bf16.mxu0 0
        %703 = vmatpush2.bf16.msra.mxu0 0
        %704 = vmatprep.subr.bf16.mxu0 0
        %705 = vmatpush2.bf16.msra.mxu0 0
        %706 = vmatprep.mubr.bf16.mxu0 0
        %707 = vmatmul.mubr.bf16.gmra.mxu0 %v672
        %v708 = vpop.f32.mrf.mxu0
        %v709 = vadd.f32 %v668, %v708
        %v710 = vpop.f32.mrf.mxu0
        %v711 = vadd.f32 %v668, %v710
        %v712 = vpop.f32.mrf.mxu0
        %v713 = vpop.f32.mrf.mxu0
        %714 = vdwg.mxu0
        %v717 = vcombine.low %v709, %v711
        %719 = vst [vmem:[%s344] sm:$0xff] %v717
        %s720 = sand.u32 %s213, 1
        %s721 = scalar_lea.sflag [#allocation3], %s720
        %s722 = sand.u32 %s213, 1
        %s723 = smul.addr %s722, 8
        %s724 = scalar_lea.vmem [#allocation2], %s723
        %s725 = sand.u32 %s239, 1
        %s726 = scalar_lea.sflag [#allocation5], %s725
        %s727 = sand.u32 %s239, 1
        %s728 = smul.addr %s727, 32
        %s729 = scalar_lea.vmem [#allocation4], %s728
        // Predicated region
        $region53: #{tpu_custom_call.1} parent=51 // pred_check
          %p730 = pneg %p223
        $region54: #{tpu_custom_call.1} parent=51 // pred_check_branch
          %732 = sbr.rel (%p730) target = $region56
        $region55: #{tpu_custom_call.1} parent=51 // pred_region
          %s734 = ssub.s32 128, 128
          %735 = vsyncadd %s721, %s734
          %s736 = smul.addr %s27, 2
          %s737 = smul.addr %s736, 64
          %s738 = scalar_lea.hbm %s8, %s737
          %s740 = sshll.u32 %s724, 4
          %s741 = int_to_ptr.vmem [resolvable:$true] %s740
          %743 = dma.vmem_to_hbm [thread:$0]  %s741, 128, %s738, %s721
        $region56: #{tpu_custom_call.1} parent=51 // pred_fallthru
          _
        // Predicated region
        $region57: #{tpu_custom_call.1} parent=51 // pred_check
          %p744 = pneg %p249
        $region58: #{tpu_custom_call.1} parent=51 // pred_check_branch
          %746 = sbr.rel (%p744) target = $region60
        $region59: #{tpu_custom_call.1} parent=51 // pred_region
          %s748 = ssub.s32 512, 512
          %749 = vsyncadd %s726, %s748
          %s750 = smul.addr %s27, 8
          %s751 = smul.addr %s750, 64
          %s752 = scalar_lea.hbm %s9, %s751
          %s753 = sshll.u32 %s729, 4
          %s754 = int_to_ptr.vmem [resolvable:$true] %s753
          %759 = dma.vmem_to_hbm [thread:$0]  %s754, 512, %s752, %s726, 128, 128, 8
        $region60: #{tpu_custom_call.1} parent=51 // pred_fallthru
          _
      $region52: #{tpu_custom_call.1} parent=5 // pred_fallthru
        _
      %p760 = scmp.le.s32.totalorder 2, %s22
      // Predicated region
      $region61: #{tpu_custom_call.1} parent=5 // pred_check
        %p761 = pneg %p760
      $region62: #{tpu_custom_call.1} parent=5 // pred_check_branch
        %763 = sbr.rel (%p761) target = $region64
      $region63: #{tpu_custom_call.1} parent=5 // pred_region
        %s764 = ssub.s32 %s22, 2
        // Predicated region
        $region65: #{tpu_custom_call.1} parent=63 // pred_check
          %p765 = pneg %p229
        $region66: #{tpu_custom_call.1} parent=63 // pred_check_branch
          %767 = sbr.rel (%p765) target = $region68
        $region67: #{tpu_custom_call.1} parent=63 // pred_region
          %s768 = sand.u32 %s214, 1
          %s769 = scalar_lea.sflag [#allocation3], %s768
          %s770 = sand.u32 %s214, 1
          %s771 = smul.addr %s770, 8
          %s772 = scalar_lea.vmem [#allocation2], %s771
          %773 = dma.done %s769, 128
        $region68: #{tpu_custom_call.1} parent=63 // pred_fallthru
          _
        // Predicated region
        $region69: #{tpu_custom_call.1} parent=63 // pred_check
          %p774 = pneg %p255
        $region70: #{tpu_custom_call.1} parent=63 // pred_check_branch
          %776 = sbr.rel (%p774) target = $region72
        $region71: #{tpu_custom_call.1} parent=63 // pred_region
          %s777 = sand.u32 %s240, 1
          %s778 = scalar_lea.sflag [#allocation5], %s777
          %s779 = sand.u32 %s240, 1
          %s780 = smul.addr %s779, 32
          %s781 = scalar_lea.vmem [#allocation4], %s780
          %782 = dma.done %s778, 512
        $region72: #{tpu_custom_call.1} parent=63 // pred_fallthru
          _
      $region64: #{tpu_custom_call.1} parent=5 // pred_fallthru
        _
    $region6: #{tpu_custom_call.1} parent=1 // loop_footer
      %s26 = sadd.s32 1, %s22
    $region7: #{tpu_custom_call.1} parent=1 // loop_footer_branch
      %21 = sbr.rel target = $region3
    $region8: #{tpu_custom_call.1} parent=1 // loop_exit
      _
    %783 = vsyncpa [#allocation3], 1
    %s784 = scalar_lea.sflag [#allocation3], 1
    %785 = vsyncpa %s784, 1
    %786 = vsyncpa [#allocation5], 1
    %s787 = scalar_lea.sflag [#allocation5], 1
    %788 = vsyncpa %s787, 1

</llo_original>
